<compile_context>
chip_gen: v7x
topology: tpu7x:2x2x1
jax: 0.10.0
libtpu: 0.0.40
codegen_flags: <defaults>
</compile_context>

<pallas_src>
import functools

import numpy as np
import jax
import jax.numpy as jnp
from jax.experimental import pallas as pl
from jax.experimental.pallas import tpu as pltpu


def _dino_loss_kernel(t_ref, c_ref, s_ref, loss_ref, newc_ref, q_scr, acc_scr, *,
                      inv_teacher_temp, inv_student_temp, ncrops, inv_denom,
                      center_momentum):
    v = pl.program_id(0)
    B = s_ref.shape[0]

    @pl.when(v == 0)
    def _init():
        t = t_ref[...].astype(jnp.float32)          # (2B, D) teacher logits
        c = c_ref[...].astype(jnp.float32)          # (1, D)  center
        # Teacher softmax targets, computed once and kept in VMEM scratch.
        logits = (t - c) * inv_teacher_temp
        m = jnp.max(logits, axis=-1, keepdims=True)
        e = jnp.exp(logits - m)
        # One-time normalisation; exact divide (pl.reciprocal(..., approx=True) would shave a few
        # cycles off this single init pass but costs softmax-target accuracy).
        q_scr[...] = (e / jnp.sum(e, axis=-1, keepdims=True)).astype(q_scr.dtype)
        acc_scr[...] = jnp.zeros_like(acc_scr)
        # Center EMA update (non-distributed path of update_center: SUM over batch rows,
        # then mean over a size-1 dim which is a no-op — replicated faithfully).
        batch_center = jnp.sum(t, axis=0, keepdims=True)
        newc_ref[...] = (c * center_momentum
                         + batch_center * (1.0 - center_momentum)).astype(newc_ref.dtype)

    @pl.when(v == 2)
    def _fold_qsum():
        # From crop 2 onward BOTH teacher views contribute; fold q0+q1 into rows [0:B) exactly
        # once.  Safe because the crop grid axis is sequential ("arbitrary") and crops 0/1 have
        # already consumed q1/q0 individually.
        q_scr[0:B, :] = q_scr[0:B, :] + q_scr[B:2 * B, :]

    # Student log-softmax for crop v (f32 math; inputs may be bf16).
    s = s_ref[...].astype(jnp.float32) * inv_student_temp
    sh = s - jnp.max(s, axis=-1, keepdims=True)
    logp = sh - jnp.log(jnp.sum(jnp.exp(sh), axis=-1, keepdims=True))   # (B, D)

    # Teacher target rows for this crop: crop 0 -> q1 (rows B:2B), crop 1 -> q0, crop >=2 -> q0+q1.
    off = pl.multiple_of(jnp.where(v == 0, B, 0), 8)
    q_eff = q_scr[pl.ds(off, B), :].astype(jnp.float32)

    # Deferred reduction: pure elementwise multiply-accumulate per step (co-issues on the VPU);
    # the cross-lane reduce happens once in the finalize.
    acc_scr[...] = acc_scr[...] + q_eff * logp

    @pl.when(v == ncrops - 1)
    def _finalize():
        col = jnp.sum(acc_scr[...], axis=0, keepdims=True)     # (1, D)
        tot = jnp.sum(col, axis=1, keepdims=True)              # (1, 1)
        loss_ref[...] = -tot * inv_denom                        # / (B * n_loss_terms)


def dino_loss_forward(student_output, teacher_output, epoch, center, *,
                      ncrops, teacher_temp_schedule, student_temp=0.1,
                      center_momentum=0.9, targets_mixup=None,
                      q_scratch_dtype=jnp.float32):
    """Functional DINOLoss.forward. Returns (total_loss, {'global_loss': loss}, new_center)."""
    # TODO(synk): targets_mixup branch is not implemented; only the standard path is translated.
    assert targets_mixup is None

    Ns, D = student_output.shape
    Nt, Dt = teacher_output.shape
    assert D == Dt and Ns % ncrops == 0
    B = Ns // ncrops
    assert Nt == 2 * B, "teacher_output must hold exactly 2 views"
    assert ncrops >= 2
    assert B % 8 == 0, "per-crop batch must be a multiple of 8 (sublane tiling of the crop block)"

    temp = float(teacher_temp_schedule[epoch])      # host-side schedule lookup, as in reference
    n_loss_terms = 2 * (ncrops - 1)

    kernel = functools.partial(
        _dino_loss_kernel,
        inv_teacher_temp=1.0 / temp,
        inv_student_temp=1.0 / student_temp,
        ncrops=ncrops,
        inv_denom=1.0 / (B * n_loss_terms),
        center_momentum=center_momentum,
    )

    # Scoped-VMEM sizing: teacher + center single-buffered, student crop double-buffered,
    # q targets + running accumulator scratch, outputs; 2x headroom, clamped.
    needed = (2 * B * D * teacher_output.dtype.itemsize        # teacher, Buffered(1)
              + D * center.dtype.itemsize                      # center,  Buffered(1)
              + 2 * B * D * student_output.dtype.itemsize      # student crop, double-buffered
              + 2 * B * D * jnp.dtype(q_scratch_dtype).itemsize  # q targets scratch
              + B * D * 4                                      # accumulator scratch
              + (D + 1) * 4 * 2)                               # outputs
    vmem_limit_bytes = int(min(max(2 * needed, 32 << 20), 128 << 20))

    loss, new_center = pl.pallas_call(
        kernel,
        out_shape=(jax.ShapeDtypeStruct((1, 1), jnp.float32),
                   jax.ShapeDtypeStruct((1, D), jnp.float32)),
        grid_spec=pltpu.PrefetchScalarGridSpec(
            num_scalar_prefetch=0,
            grid=(ncrops,),
            in_specs=[
                # Teacher & center: constant block index -> resident; single-buffer them.
                pl.BlockSpec((2 * B, D), lambda v: (0, 0), pipeline_mode=pl.Buffered(1)),
                pl.BlockSpec((1, D),     lambda v: (0, 0), pipeline_mode=pl.Buffered(1)),
                # Student crop v streams through the default double-buffered pipeline.
                pl.BlockSpec((B, D),     lambda v: (v, 0)),
            ],
            out_specs=[
                pl.BlockSpec((1, 1), lambda v: (0, 0)),       # scalar loss (written at finalize)
                pl.BlockSpec((1, D), lambda v: (0, 0)),       # updated center (written at step 0)
            ],
            scratch_shapes=[
                pltpu.VMEM((2 * B, D), q_scratch_dtype),      # teacher softmax targets (+ fold)
                pltpu.VMEM((B, D), jnp.float32),              # elementwise loss accumulator
            ],
        ),
        compiler_params=pltpu.CompilerParams(
            dimension_semantics=("arbitrary",),               # crop axis is a serial reduction
            vmem_limit_bytes=vmem_limit_bytes),
    )(teacher_output, center, student_output)

    total = loss[0, 0]
    # jit-safe aux: return the JAX scalar, not float(total)
    return total, {"global_loss": total}, new_center


if __name__ == "__main__":
    # ---- deterministic "module init" ----
    out_dim = 128
    ncrops = 4
    B = 8                     # per-crop batch
    student_temp = 0.1
    center_momentum = 0.9
    warmup_teacher_temp, teacher_temp, warmup_epochs, nepochs = 0.04, 0.07, 5, 20
    teacher_temp_schedule = np.concatenate((
        np.linspace(warmup_teacher_temp, teacher_temp, warmup_epochs),
        np.ones(nepochs - warmup_epochs) * teacher_temp))
    center = jnp.zeros((1, out_dim), jnp.float32)   # registered buffer

    # ---- inputs ----
    key = jax.random.PRNGKey(0)
    k1, k2 = jax.random.split(key)
    student_output = jax.random.normal(k1, (ncrops * B, out_dim), dtype=jnp.float32)
    teacher_output = jax.random.normal(k2, (2 * B, out_dim), dtype=jnp.float32)
    epoch = 3

    total, aux, new_center = dino_loss_forward(
        student_output, teacher_output, epoch, center,
        ncrops=ncrops, teacher_temp_schedule=teacher_temp_schedule,
        student_temp=student_temp, center_momentum=center_momentum,
        targets_mixup=None)
    total = jax.block_until_ready(total)
    new_center = jax.block_until_ready(new_center)

    # ---- pure-JAX reference of the PyTorch semantics ----
    temp = teacher_temp_schedule[epoch]
    student_out = student_output / student_temp
    student_chunks = jnp.split(student_out, ncrops, axis=0)
    q_full = jax.nn.softmax((teacher_output - center) / temp, axis=-1)
    teacher_chunks = jnp.split(q_full, 2, axis=0)
    ref_total = 0.0
    n_terms = 0
    for iq, q in enumerate(teacher_chunks):
        for v in range(ncrops):
            if v == iq:
                continue
            logp = jax.nn.log_softmax(student_chunks[v], axis=-1)
            ref_total += jnp.mean(jnp.sum(-q * logp, axis=-1))
            n_terms += 1
    ref_total = ref_total / n_terms
    batch_center = jnp.sum(teacher_output, axis=0, keepdims=True)
    batch_center = jnp.mean(batch_center, axis=0, keepdims=True)   # no-op, as in reference
    ref_center = center * center_momentum + batch_center * (1 - center_momentum)

    assert jnp.allclose(total, ref_total, atol=1e-5, rtol=1e-5), (float(total), float(ref_total))
    assert jnp.allclose(new_center, ref_center, atol=1e-5, rtol=1e-5)
    assert jnp.allclose(aux["global_loss"], ref_total, atol=1e-5, rtol=1e-5)

    print("KERNEL_OK")
</pallas_src>

<mosaic_0001>
module attributes {stable_mosaic.version = 11 : i64} {
  func.func @_dino_loss_kernel(%arg0: i32, %arg1: memref<16x128xf32, #tpu.memory_space<vmem>>, %arg2: memref<1x128xf32, #tpu.memory_space<vmem>>, %arg3: memref<8x128xf32, #tpu.memory_space<vmem>>, %arg4: memref<1x1xf32, #tpu.memory_space<vmem>>, %arg5: memref<1x128xf32, #tpu.memory_space<vmem>>, %arg6: memref<16x128xf32, #tpu.memory_space<vmem>>, %arg7: memref<8x128xf32, #tpu.memory_space<vmem>>) attributes {dimension_semantics = [#tpu.dimension_semantics<arbitrary>], iteration_bounds = array<i64: 4>, scalar_prefetch = 0 : i64, scratch_operands = 2 : i64, tpu.core_type = #tpu.core_type<tc>, window_params = [{pipeline_mode = #tpu.pipeline_mode<synchronous>, transform_indices = @transform_0, window_bounds = array<i64: 16, 128>}, {pipeline_mode = #tpu.pipeline_mode<synchronous>, transform_indices = @transform_1, window_bounds = array<i64: 1, 128>}, {transform_indices = @transform_2, window_bounds = array<i64: 8, 128>}, {pipeline_mode = #tpu.pipeline_mode<synchronous>, transform_indices = @transform_3, window_bounds = array<i64: 1, 1>}, {pipeline_mode = #tpu.pipeline_mode<synchronous>, transform_indices = @transform_4, window_bounds = array<i64: 1, 128>}]} {
    %c0_i32 = arith.constant 0 : i32
    %0 = arith.cmpi eq, %arg0, %c0_i32 : i32
    %1 = arith.extui %0 : i1 to i32
    %c0_i32_0 = arith.constant 0 : i32
    %2 = arith.cmpi ne, %1, %c0_i32_0 : i32
    scf.if %2 {
      %c0_13 = arith.constant 0 : index
      %c0_14 = arith.constant 0 : index
      %31 = vector.load %arg1[%c0_13, %c0_14] : memref<16x128xf32, #tpu.memory_space<vmem>>, vector<16x128xf32>
      %c0_15 = arith.constant 0 : index
      %c0_16 = arith.constant 0 : index
      %32 = vector.load %arg2[%c0_15, %c0_16] : memref<1x128xf32, #tpu.memory_space<vmem>>, vector<1x128xf32>
      %33 = vector.broadcast %32 : vector<1x128xf32> to vector<16x128xf32>
      %34 = arith.subf %31, %33 : vector<16x128xf32>
      %cst_17 = arith.constant 1.600000e+01 : f32
      %35 = vector.broadcast %cst_17 : f32 to vector<16x128xf32>
      %36 = arith.mulf %34, %35 : vector<16x128xf32>
      %cst_18 = arith.constant dense<0xFF800000> : vector<16xf32>
      %37 = vector.multi_reduction <maximumf>, %36, %cst_18 [1] : vector<16x128xf32> to vector<16xf32>
      %38 = vector.shape_cast %37 : vector<16xf32> to vector<16x1xf32>
      %39 = vector.broadcast %38 : vector<16x1xf32> to vector<16x128xf32>
      %40 = arith.subf %36, %39 : vector<16x128xf32>
      %41 = math.exp %40 : vector<16x128xf32>
      %cst_19 = arith.constant dense<0.000000e+00> : vector<16xf32>
      %42 = vector.multi_reduction <add>, %41, %cst_19 [1] : vector<16x128xf32> to vector<16xf32>
      %43 = vector.shape_cast %42 : vector<16xf32> to vector<16x1xf32>
      %44 = vector.broadcast %43 : vector<16x1xf32> to vector<16x128xf32>
      %45 = arith.divf %41, %44 : vector<16x128xf32>
      %c0_20 = arith.constant 0 : index
      %c0_21 = arith.constant 0 : index
      %46 = vector.load %arg6[%c0_20, %c0_21] : memref<16x128xf32, #tpu.memory_space<vmem>>, vector<16x128xf32>
      tpu.vector_store %arg6[%c0_20, %c0_21], %45 {strides = array<i32>} : memref<16x128xf32, #tpu.memory_space<vmem>>, vector<16x128xf32>,
      %cst_22 = arith.constant 0.000000e+00 : f32
      %47 = vector.broadcast %cst_22 : f32 to vector<8x128xf32>
      %c0_23 = arith.constant 0 : index
      %c0_24 = arith.constant 0 : index
      %48 = vector.load %arg7[%c0_23, %c0_24] : memref<8x128xf32, #tpu.memory_space<vmem>>, vector<8x128xf32>
      tpu.vector_store %arg7[%c0_23, %c0_24], %47 {strides = array<i32>} : memref<8x128xf32, #tpu.memory_space<vmem>>, vector<8x128xf32>,
      %cst_25 = arith.constant dense<0.000000e+00> : vector<128xf32>
      %49 = vector.multi_reduction <add>, %31, %cst_25 [0] : vector<16x128xf32> to vector<128xf32>
      %50 = vector.shape_cast %49 : vector<128xf32> to vector<1x128xf32>
      %cst_26 = arith.constant 0.899999976 : f32
      %51 = vector.broadcast %cst_26 : f32 to vector<1x128xf32>
      %52 = arith.mulf %32, %51 : vector<1x128xf32>
      %cst_27 = arith.constant 1.000000e-01 : f32
      %53 = vector.broadcast %cst_27 : f32 to vector<1x128xf32>
      %54 = arith.mulf %50, %53 : vector<1x128xf32>
      %55 = arith.addf %52, %54 : vector<1x128xf32>
      %c0_28 = arith.constant 0 : index
      %c0_29 = arith.constant 0 : index
      %56 = vector.load %arg5[%c0_28, %c0_29] : memref<1x128xf32, #tpu.memory_space<vmem>>, vector<1x128xf32>
      tpu.vector_store %arg5[%c0_28, %c0_29], %55 {strides = array<i32>} : memref<1x128xf32, #tpu.memory_space<vmem>>, vector<1x128xf32>,
    } else {
    }
    %c2_i32 = arith.constant 2 : i32
    %3 = arith.cmpi eq, %arg0, %c2_i32 : i32
    %4 = arith.extui %3 : i1 to i32
    %c0_i32_1 = arith.constant 0 : i32
    %5 = arith.cmpi ne, %4, %c0_i32_1 : i32
    scf.if %5 {
      %c0_13 = arith.constant 0 : index
      %c0_14 = arith.constant 0 : index
      %31 = vector.load %arg6[%c0_13, %c0_14] : memref<16x128xf32, #tpu.memory_space<vmem>>, vector<8x128xf32>
      %c8 = arith.constant 8 : index
      %c0_15 = arith.constant 0 : index
      %32 = vector.load %arg6[%c8, %c0_15] : memref<16x128xf32, #tpu.memory_space<vmem>>, vector<8x128xf32>
      %33 = arith.addf %31, %32 : vector<8x128xf32>
      %c0_16 = arith.constant 0 : index
      %c0_17 = arith.constant 0 : index
      %34 = vector.load %arg6[%c0_16, %c0_17] : memref<16x128xf32, #tpu.memory_space<vmem>>, vector<8x128xf32>
      tpu.vector_store %arg6[%c0_16, %c0_17], %33 {strides = array<i32>} : memref<16x128xf32, #tpu.memory_space<vmem>>, vector<8x128xf32>,
    } else {
    }
    %c0 = arith.constant 0 : index
    %c0_2 = arith.constant 0 : index
    %6 = vector.load %arg3[%c0, %c0_2] : memref<8x128xf32, #tpu.memory_space<vmem>>, vector<8x128xf32>
    %cst = arith.constant 1.000000e+01 : f32
    %7 = vector.broadcast %cst : f32 to vector<8x128xf32>
    %8 = arith.mulf %6, %7 : vector<8x128xf32>
    %cst_3 = arith.constant dense<0xFF800000> : vector<8xf32>
    %9 = vector.multi_reduction <maximumf>, %8, %cst_3 [1] : vector<8x128xf32> to vector<8xf32>
    %10 = vector.shape_cast %9 : vector<8xf32> to vector<8x1xf32>
    %11 = vector.broadcast %10 : vector<8x1xf32> to vector<8x128xf32>
    %12 = arith.subf %8, %11 : vector<8x128xf32>
    %13 = math.exp %12 : vector<8x128xf32>
    %cst_4 = arith.constant dense<0.000000e+00> : vector<8xf32>
    %14 = vector.multi_reduction <add>, %13, %cst_4 [1] : vector<8x128xf32> to vector<8xf32>
    %15 = vector.shape_cast %14 : vector<8xf32> to vector<8x1xf32>
    %16 = math.log %15 : vector<8x1xf32>
    %17 = vector.broadcast %16 : vector<8x1xf32> to vector<8x128xf32>
    %18 = arith.subf %12, %17 : vector<8x128xf32>
    %c0_i32_5 = arith.constant 0 : i32
    %19 = arith.cmpi eq, %arg0, %c0_i32_5 : i32
    %c8_i32 = arith.constant 8 : i32
    %c0_i32_6 = arith.constant 0 : i32
    %20 = arith.select %19, %c8_i32, %c0_i32_6 : i32
    %21 = tpu.assume_multiple %20, 8 : i32
    %22 = arith.index_cast %21 : i32 to index
    %c0_7 = arith.constant 0 : index
    %23 = vector.load %arg6[%22, %c0_7] : memref<16x128xf32, #tpu.memory_space<vmem>>, vector<8x128xf32>
    %c0_8 = arith.constant 0 : index
    %c0_9 = arith.constant 0 : index
    %24 = vector.load %arg7[%c0_8, %c0_9] : memref<8x128xf32, #tpu.memory_space<vmem>>, vector<8x128xf32>
    %25 = arith.mulf %23, %18 : vector<8x128xf32>
    %26 = arith.addf %24, %25 : vector<8x128xf32>
    %c0_10 = arith.constant 0 : index
    %c0_11 = arith.constant 0 : index
    %27 = vector.load %arg7[%c0_10, %c0_11] : memref<8x128xf32, #tpu.memory_space<vmem>>, vector<8x128xf32>
    tpu.vector_store %arg7[%c0_10, %c0_11], %26 {strides = array<i32>} : memref<8x128xf32, #tpu.memory_space<vmem>>, vector<8x128xf32>,
    %c3_i32 = arith.constant 3 : i32
    %28 = arith.cmpi eq, %arg0, %c3_i32 : i32
    %29 = arith.extui %28 : i1 to i32
    %c0_i32_12 = arith.constant 0 : i32
    %30 = arith.cmpi ne, %29, %c0_i32_12 : i32
    scf.if %30 {
      %c0_13 = arith.constant 0 : index
      %c0_14 = arith.constant 0 : index
      %31 = vector.load %arg7[%c0_13, %c0_14] : memref<8x128xf32, #tpu.memory_space<vmem>>, vector<8x128xf32>
      %cst_15 = arith.constant dense<0.000000e+00> : vector<128xf32>
      %32 = vector.multi_reduction <add>, %31, %cst_15 [0] : vector<8x128xf32> to vector<128xf32>
      %33 = vector.shape_cast %32 : vector<128xf32> to vector<1x128xf32>
      %cst_16 = arith.constant dense<0.000000e+00> : vector<1xf32>
      %34 = vector.multi_reduction <add>, %33, %cst_16 [1] : vector<1x128xf32> to vector<1xf32>
      %35 = vector.shape_cast %34 : vector<1xf32> to vector<1x1xf32>
      %cst_17 = arith.constant 0.000000e+00 : f32
      %36 = vector.broadcast %cst_17 : f32 to vector<1x1xf32>
      %37 = arith.subf %36, %35 : vector<1x1xf32>
      %cst_18 = arith.constant 0.020833334 : f32
      %38 = vector.broadcast %cst_18 : f32 to vector<1x1xf32>
      %39 = arith.mulf %37, %38 : vector<1x1xf32>
      %c0_19 = arith.constant 0 : index
      %c0_20 = arith.constant 0 : index
      %40 = vector.load %arg4[%c0_19, %c0_20] : memref<1x1xf32, #tpu.memory_space<vmem>>, vector<1x1xf32>
      tpu.vector_store %arg4[%c0_19, %c0_20], %39 {strides = array<i32>} : memref<1x1xf32, #tpu.memory_space<vmem>>, vector<1x1xf32>,
    } else {
    }
    return
  }
  func.func @transform_0(%arg0: i32) -> (i32, i32) {
    %c0_i32 = arith.constant 0 : i32
    %c0_i32_0 = arith.constant 0 : i32
    %c0_i32_1 = arith.constant 0 : i32
    return %c0_i32, %c0_i32_0 : i32, i32
  }
  func.func @transform_1(%arg0: i32) -> (i32, i32) {
    %c0_i32 = arith.constant 0 : i32
    %c0_i32_0 = arith.constant 0 : i32
    %c0_i32_1 = arith.constant 0 : i32
    return %c0_i32, %c0_i32_0 : i32, i32
  }
  func.func @transform_2(%arg0: i32) -> (i32, i32) {
    %c0_i32 = arith.constant 0 : i32
    %c0_i32_0 = arith.constant 0 : i32
    return %arg0, %c0_i32 : i32, i32
  }
  func.func @transform_3(%arg0: i32) -> (i32, i32) {
    %c0_i32 = arith.constant 0 : i32
    %c0_i32_0 = arith.constant 0 : i32
    %c0_i32_1 = arith.constant 0 : i32
    return %c0_i32, %c0_i32_0 : i32, i32
  }
  func.func @transform_4(%arg0: i32) -> (i32, i32) {
    %c0_i32 = arith.constant 0 : i32
    %c0_i32_0 = arith.constant 0 : i32
    %c0_i32_1 = arith.constant 0 : i32
    return %c0_i32, %c0_i32_0 : i32, i32
  }
}

</mosaic_0001>

<llo_original>
// kernel: tpu_custom_call.1
$region0: #{tpu_custom_call.1}
  #allocation0 [shape = 'u32[]', space=smem, size = 0x4, offset = 0x4, fixed_abs, tag = 'smem constant byte address 0x4 - core index']
  #allocation1 [shape = 'u32[144,128]{1,0:T(1,128)}', space=vmem, size = 0x12000, scoped, tag = 'internal scratch']
  #allocation2 [shape = 'f32[16,128]{1,0:T(8,128)}', space=vmem, size = 0x2000, scoped, tag = 'scratch operand']
  #allocation3 [shape = 'f32[8,128]{1,0:T(8,128)}', space=vmem, size = 0x1000, scoped, tag = 'scratch operand']
  %s0 = inlined_call_operand.hbm [shape: f32[16,128], index: 0, kind: input, shape index: {}]
  %s1 = inlined_call_operand.vmem [shape: f32[1,128], index: 1, kind: input, shape index: {}]
  %s2 = inlined_call_operand.hbm [shape: f32[32,128], index: 2, kind: input, shape index: {}]
  %s3 = inlined_call_operand.hbm [shape: f32[1,1], index: 3, kind: output, shape index: {0}]
  %s4 = inlined_call_operand.hbm [shape: f32[1,128], index: 4, kind: output, shape index: {1}]
  %5 = xla_tuple %s3, %s4
  %s6 = sld [smem:[#allocation0]]
  $region73: #{tpu_custom_call.1} parent=0
    _
  %s8 = ssub.s32 1, %s6
  %s9 = scalar_select 0, %s8, %s6
  $region1: #{tpu_custom_call.1} parent=0
    #allocation4 [shape = 'u8[8192]{0}', space=vmem, size = 0x2000, scoped, tag = 'input window, operand 0, single buffered']
    #allocation5 [shape = 's32[2]{0}', space=sflag, size = 0x8, scoped, tag = 'scoped memory for tpu_custom_call.1']
    #allocation6 [shape = 's32[2]{0}', space=sflag, size = 0x8, scoped, tag = 'scoped memory for tpu_custom_call.1']
    #allocation7 [shape = 'u8[8192]{0}', space=vmem, size = 0x2000, scoped, tag = 'input window, operand 2']
    #allocation8 [shape = 's32[2]{0}', space=sflag, size = 0x8, scoped, tag = 'scoped memory for tpu_custom_call.1']
    #allocation9 [shape = 'u8[512]{0}', space=vmem, size = 0x400, scoped, tag = 'output window, operand 0, single buffered']
    #allocation10 [shape = 'u8[512]{0}', space=vmem, size = 0x400, scoped, tag = 'output window, operand 1, single buffered']
    #allocation11 [shape = 's32[1]{0}', space=sflag, size = 0x4, scoped, tag = 'scoped memory for tpu_custom_call.1']
    %10 = vsyncpa [#allocation5], 0
    %11 = vsyncpa [#allocation8], 0
    %s12 = scalar_lea.sflag [#allocation8], 1
    %13 = vsyncpa %s12, 0
    %14 = vsyncpa [#allocation6], 0
    %15 = vsyncpa [#allocation11], 0
    loop: start=0, step=1, limit=6
    $region2: #{tpu_custom_call.1} parent=1 // loop_pre_header
      _
    $region3: #{tpu_custom_call.1} parent=1 // loop_header
      %s17 = sphi 0, %s21
      %p18 = scmp.ge.s32.totalorder %s17, 6
      %s25 = sphi 0, %s25
      %s27 = sphi 0, %s25
      %s28 = sphi 0, %s27
      %s42 = sphi 0, %s28
      %s46 = sphi 0, %s46
      %s48 = sphi 0, %s46
      %s49 = sphi 0, %s48
      %s63 = sphi 0, %s49
      %s69 = sphi 0, %s71
      %s72 = sphi 0, %s69
      %s73 = sphi 0, %s72
      %s89 = sphi 0, %s73
      %s93 = sphi 0, %s93
      %s95 = sphi 0, %s93
      %s96 = sphi 0, %s95
      %s110 = sphi 0, %s96
      %s114 = sphi 0, %s114
      %s116 = sphi 0, %s114
      %s117 = sphi 0, %s116
      %s131 = sphi 0, %s117
    $region4: #{tpu_custom_call.1} parent=1 // loop_header_branch
      %20 = sbr.rel (%p18) target = $region8
    $region5: #{tpu_custom_call.1} parent=1 // loop_body
      %s22 = ssub.s32 %s17, 1
      %s23 = ssub.s32 %s17, 2
      %s24 = sadd.s32 %s17, 1
      %s26 = sadd.s32 %s25, 1
      %p29 = scmp.eq.s32.totalorder %s17, 3
      %p30 = scmp.ne.s32.totalorder %s25, %s27
      %p31 = scmp.eq.s32.totalorder %s17, 0
      %p32 = por %p30, %p31
      %p33 = scmp.ne.s32.totalorder %s25, %s27
      %p34 = scmp.eq.s32.totalorder %s22, 3
      %p35 = por %p33, %p34
      %p36 = scmp.ne.s32.totalorder %s27, %s28
      %p37 = scmp.eq.s32.totalorder %s22, 0
      %p38 = por %p36, %p37
      %p39 = scmp.ne.s32.totalorder %s27, %s28
      %p40 = scmp.eq.s32.totalorder %s23, 3
      %p41 = por %p39, %p40
      %p43 = scmp.ne.s32.totalorder %s28, %s42
      %p44 = scmp.eq.s32.totalorder %s23, 0
      %p45 = por %p43, %p44
      %s47 = sadd.s32 %s46, 1
      %p50 = scmp.eq.s32.totalorder %s17, 3
      %p51 = scmp.ne.s32.totalorder %s46, %s48
      %p52 = scmp.eq.s32.totalorder %s17, 0
      %p53 = por %p51, %p52
      %p54 = scmp.ne.s32.totalorder %s46, %s48
      %p55 = scmp.eq.s32.totalorder %s22, 3
      %p56 = por %p54, %p55
      %p57 = scmp.ne.s32.totalorder %s48, %s49
      %p58 = scmp.eq.s32.totalorder %s22, 0
      %p59 = por %p57, %p58
      %p60 = scmp.ne.s32.totalorder %s48, %s49
      %p61 = scmp.eq.s32.totalorder %s23, 3
      %p62 = por %p60, %p61
      %p64 = scmp.ne.s32.totalorder %s49, %s63
      %p65 = scmp.eq.s32.totalorder %s23, 0
      %p66 = por %p64, %p65
      %s67 = ssub.s32 %s17, %s24
      %p68 = scmp.eq.s32.totalorder %s67, 0
      %s70 = sadd.s32 %s69, 1
      %s71 = scalar_select %p68, %s69, %s70
      %p74 = pneg %p68
      %p75 = scmp.eq.s32.totalorder %s17, 3
      %p76 = por %p74, %p75
      %p77 = scmp.ne.s32.totalorder %s69, %s72
      %p78 = scmp.eq.s32.totalorder %s17, 0
      %p79 = por %p77, %p78
      %p80 = scmp.ne.s32.totalorder %s69, %s72
      %p81 = scmp.eq.s32.totalorder %s22, 3
      %p82 = por %p80, %p81
      %p83 = scmp.ne.s32.totalorder %s72, %s73
      %p84 = scmp.eq.s32.totalorder %s22, 0
      %p85 = por %p83, %p84
      %p86 = scmp.ne.s32.totalorder %s72, %s73
      %p87 = scmp.eq.s32.totalorder %s23, 3
      %p88 = por %p86, %p87
      %p90 = scmp.ne.s32.totalorder %s73, %s89
      %p91 = scmp.eq.s32.totalorder %s23, 0
      %p92 = por %p90, %p91
      %s94 = sadd.s32 %s93, 1
      %p97 = scmp.eq.s32.totalorder %s17, 3
      %p98 = scmp.ne.s32.totalorder %s93, %s95
      %p99 = scmp.eq.s32.totalorder %s17, 0
      %p100 = por %p98, %p99
      %p101 = scmp.ne.s32.totalorder %s93, %s95
      %p102 = scmp.eq.s32.totalorder %s22, 3
      %p103 = por %p101, %p102
      %p104 = scmp.ne.s32.totalorder %s95, %s96
      %p105 = scmp.eq.s32.totalorder %s22, 0
      %p106 = por %p104, %p105
      %p107 = scmp.ne.s32.totalorder %s95, %s96
      %p108 = scmp.eq.s32.totalorder %s23, 3
      %p109 = por %p107, %p108
      %p111 = scmp.ne.s32.totalorder %s96, %s110
      %p112 = scmp.eq.s32.totalorder %s23, 0
      %p113 = por %p111, %p112
      %s115 = sadd.s32 %s114, 1
      %p118 = scmp.eq.s32.totalorder %s17, 3
      %p119 = scmp.ne.s32.totalorder %s114, %s116
      %p120 = scmp.eq.s32.totalorder %s17, 0
      %p121 = por %p119, %p120
      %p122 = scmp.ne.s32.totalorder %s114, %s116
      %p123 = scmp.eq.s32.totalorder %s22, 3
      %p124 = por %p122, %p123
      %p125 = scmp.ne.s32.totalorder %s116, %s117
      %p126 = scmp.eq.s32.totalorder %s22, 0
      %p127 = por %p125, %p126
      %p128 = scmp.ne.s32.totalorder %s116, %s117
      %p129 = scmp.eq.s32.totalorder %s23, 3
      %p130 = por %p128, %p129
      %p132 = scmp.ne.s32.totalorder %s117, %s131
      %p133 = scmp.eq.s32.totalorder %s23, 0
      %p134 = por %p132, %p133
      %p135 = scmp.le.s32.totalorder 1, %s17
      %p136 = scmp.lt.s32.totalorder %s17, 5
      %p137 = pnand %p135, %p136
      %p138 = pneg %p137
      // Predicated region
      $region9: #{tpu_custom_call.1} parent=5 // pred_check
        _
      $region10: #{tpu_custom_call.1} parent=5 // pred_check_branch
        %140 = sbr.rel (%p137) target = $region12
      $region11: #{tpu_custom_call.1} parent=5 // pred_region
        %s141 = ssub.s32 %s17, 1
        // Predicated region
        $region13: #{tpu_custom_call.1} parent=11 // pred_check
          %p142 = pneg %p38
        $region14: #{tpu_custom_call.1} parent=11 // pred_check_branch
          %144 = sbr.rel (%p142) target = $region16
        $region15: #{tpu_custom_call.1} parent=11 // pred_region
          %s146 = ssub.s32 256, 256
          %147 = vsyncadd [#allocation5], %s146
          %s148 = sshll.u32 [#allocation4], 4
          %s149 = int_to_ptr.vmem [resolvable:$true] %s148
          %154 = dma.hbm_to_vmem [thread:$0]  %s0, 256, %s149, [#allocation5], 128, 128, 8
        $region16: #{tpu_custom_call.1} parent=11 // pred_fallthru
          _
        // Predicated region
        $region17: #{tpu_custom_call.1} parent=11 // pred_check
          %p155 = pneg %p59
        $region18: #{tpu_custom_call.1} parent=11 // pred_check_branch
          %157 = sbr.rel (%p155) target = $region20
        $region19: #{tpu_custom_call.1} parent=11 // pred_region
          _
        $region20: #{tpu_custom_call.1} parent=11 // pred_fallthru
          _
      $region12: #{tpu_custom_call.1} parent=5 // pred_fallthru
        _
      %p158 = scmp.lt.s32.totalorder %s17, 4
      // Predicated region
      $region21: #{tpu_custom_call.1} parent=5 // pred_check
        %p159 = pneg %p158
      $region22: #{tpu_custom_call.1} parent=5 // pred_check_branch
        %161 = sbr.rel (%p159) target = $region24
      $region23: #{tpu_custom_call.1} parent=5 // pred_region
        // Predicated region
        $region25: #{tpu_custom_call.1} parent=23 // pred_check
          %p162 = pneg %p79
        $region26: #{tpu_custom_call.1} parent=23 // pred_check_branch
          %164 = sbr.rel (%p162) target = $region28
        $region27: #{tpu_custom_call.1} parent=23 // pred_region
          %s165 = sand.u32 %s69, 1
          %s166 = scalar_lea.sflag [#allocation8], %s165
          %s167 = sand.u32 %s69, 1
          %s168 = smul.addr %s167, 8
          %s169 = scalar_lea.vmem [#allocation7], %s168
          %s171 = ssub.s32 128, 128
          %172 = vsyncadd %s166, %s171
          %s173 = smul.addr %s17, 128
          %s174 = scalar_lea.hbm %s2, %s173
          %s176 = sshll.u32 %s169, 4
          %s177 = int_to_ptr.vmem [resolvable:$true] %s176
          %179 = dma.hbm_to_vmem [thread:$0]  %s174, 128, %s177, %s166
        $region28: #{tpu_custom_call.1} parent=23 // pred_fallthru
          _
      $region24: #{tpu_custom_call.1} parent=5 // pred_fallthru
        _
      %p180 = scmp.le.s32.totalorder 1, %s17
      %p181 = scmp.lt.s32.totalorder %s17, 5
      %p182 = pnand %p180, %p181
      %p183 = pneg %p182
      // Predicated region
      $region29: #{tpu_custom_call.1} parent=5 // pred_check
        _
      $region30: #{tpu_custom_call.1} parent=5 // pred_check_branch
        %185 = sbr.rel (%p182) target = $region32
      $region31: #{tpu_custom_call.1} parent=5 // pred_region
        %s186 = ssub.s32 %s17, 1
        // Predicated region
        $region33: #{tpu_custom_call.1} parent=31 // pred_check
          %p187 = pneg %p38
        $region34: #{tpu_custom_call.1} parent=31 // pred_check_branch
          %189 = sbr.rel (%p187) target = $region36
        $region35: #{tpu_custom_call.1} parent=31 // pred_region
          %190 = dma.done [#allocation5], 256
        $region36: #{tpu_custom_call.1} parent=31 // pred_fallthru
          _
        %s191 = sand.u32 %s72, 1
        %s192 = scalar_lea.sflag [#allocation8], %s191
        %s193 = sand.u32 %s72, 1
        %s194 = smul.addr %s193, 8
        %s195 = scalar_lea.vmem [#allocation7], %s194
        // Predicated region
        $region37: #{tpu_custom_call.1} parent=31 // pred_check
          %p196 = pneg %p85
        $region38: #{tpu_custom_call.1} parent=31 // pred_check_branch
          %198 = sbr.rel (%p196) target = $region40
        $region39: #{tpu_custom_call.1} parent=31 // pred_region
          %199 = dma.done %s192, 128
        $region40: #{tpu_custom_call.1} parent=31 // pred_fallthru
          _
        %p200 = pneg %p38
        %p201 = pneg %p35
        %p202 = pneg %p59
        %p203 = pneg %p56
        %s204 = sand.u32 %s72, 1
        %s205 = scalar_lea.sflag [#allocation8], %s204
        %s206 = sand.u32 %s72, 1
        %s207 = smul.addr %s206, 8
        %s208 = scalar_lea.vmem [#allocation7], %s207
        %p209 = pneg %p85
        %p210 = pneg %p82
        %p211 = pneg %p106
        %p212 = pneg %p103
        %p213 = pneg %p127
        %p214 = pneg %p124
        %p215 = scmp.eq.s32.totalorder %s22, 0
        // Predicated region
        $region41: #{tpu_custom_call.1} parent=31 // pred_check
          %p216 = pneg %p215
        $region42: #{tpu_custom_call.1} parent=31 // pred_check_branch
          %218 = sbr.rel (%p216) target = $region44
        $region43: #{tpu_custom_call.1} parent=31 // pred_region
          %v219 = vld [vmem:[#allocation4] sm:$0xff]
          %v220 = vld [vmem:[#allocation4 + $0x8] sm:$0xff]
          %v221 = vld [vmem:[%s1] sm:$0x1]
          %v223 = vlaneseq
          %v224 = vshrl.u32 %v223, 7
          %v225 = vsub.s32 0, %v224
          %v226 = vrot.slane %v221, %v225
          %v228 = vsub.f32 %v219, %v226
          %v229 = vsub.f32 %v220, %v226
          %v230 = vmul.f32 %v228, 16.0
          %v231 = vmul.f32 %v229, 16.0
          %232 = vmax.xlane.f32.xlu0 %v230
          %v233 = vpop.xlane.xlu0 %232
          %234 = vmax.xlane.f32.xlu0 %v231
          %v235 = vpop.xlane.xlu0 %234
          %v236 = vsub.f32 %v230, %v233
          %v237 = vsub.f32 %v231, %v235
          %v238 = vmul.f32 %v236, 1.442695
          %v239 = vpow.pop %v238
          %v240 = vmul.f32 %v237, 1.442695
          %v241 = vpow.pop %v240
          %242 = vadd.xlane.f32.xlu0 %v239
          %v243 = vpop.xlane.xlu0 %242
          %244 = vadd.xlane.f32.xlu0 %v241
          %v245 = vpop.xlane.xlu0 %244
          %v246 = vrcp.pop %v243
          %v247 = vmul.f32 %v239, %v246
          %v248 = vrcp.pop %v245
          %v249 = vmul.f32 %v241, %v248
          %250 = vst [vmem:[#allocation2] sm:$0xff] %v247
          %251 = vst [vmem:[#allocation2 + $0x8] sm:$0xff] %v249
          %252 = vst [vmem:[#allocation3] sm:$0xff] 0.0
          %v253 = vadd.f32 %v219, %v220
          %v254 = vrot.slane %v253, 4
          %v255 = vadd.f32 %v253, %v254
          %v256 = vrot.slane %v255, 2
          %v257 = vadd.f32 %v255, %v256
          %v258 = vrot.slane %v257, 1
          %v259 = vadd.f32 %v257, %v258
          %v260 = vmul.f32 %v221, 0.9
          %v261 = vmul.f32 %v259, 0.1
          %v262 = vadd.f32 %v260, %v261
          %263 = vst [vmem:[#allocation10] sm:$0x1] %v262
        $region44: #{tpu_custom_call.1} parent=31 // pred_fallthru
          _
        %p264 = scmp.eq.s32.totalorder %s22, 2
        // Predicated region
        $region45: #{tpu_custom_call.1} parent=31 // pred_check
          %p265 = pneg %p264
        $region46: #{tpu_custom_call.1} parent=31 // pred_check_branch
          %267 = sbr.rel (%p265) target = $region48
        $region47: #{tpu_custom_call.1} parent=31 // pred_region
          %v268 = vld [vmem:[#allocation2] sm:$0xff]
          %v269 = vld [vmem:[#allocation2 + $0x8] sm:$0xff]
          %v270 = vadd.f32 %v268, %v269
          %271 = vst [vmem:[#allocation2] sm:$0xff] %v270
        $region48: #{tpu_custom_call.1} parent=31 // pred_fallthru
          _
        %v272 = vld [vmem:[%s195] sm:$0xff]
        %v273 = vmul.f32 %v272, 10.0
        %274 = vmax.xlane.f32.xlu0 %v273
        %v275 = vpop.xlane.xlu0 %274
        %v276 = vsub.f32 %v273, %v275
        %v277 = vmul.f32 %v276, 1.442695
        %v278 = vpow.pop %v277
        %279 = vadd.xlane.f32.xlu0 %v278
        %v280 = vpop.xlane.xlu0 %279
        %v281 = vlog2.pop %v280
        %v282 = vmul.f32 %v281, 0.6931472
        %v283 = vsub.f32 %v276, %v282
        %s284 = scalar_select %p215, 8, 0
        %s285 = scalar_lea.vmem [#allocation2], %s284
        %v286 = vld [vmem:[%s285] sm:$0xff]
        %v287 = vld [vmem:[#allocation3] sm:$0xff]
        %v288 = vmul.f32 %v286, %v283
        %v289 = vadd.f32 %v287, %v288
        %290 = vst [vmem:[#allocation3] sm:$0xff] %v289
        %p291 = scmp.eq.s32.totalorder %s22, 3
        // Predicated region
        $region49: #{tpu_custom_call.1} parent=31 // pred_check
          %p292 = pneg %p291
        $region50: #{tpu_custom_call.1} parent=31 // pred_check_branch
          %294 = sbr.rel (%p292) target = $region52
        $region51: #{tpu_custom_call.1} parent=31 // pred_region
          %v295 = vld [vmem:[#allocation3] sm:$0xff]
          %v296 = vrot.slane %v295, 4
          %v297 = vadd.f32 %v295, %v296
          %v298 = vrot.slane %v297, 2
          %v299 = vadd.f32 %v297, %v298
          %v300 = vrot.slane %v299, 1
          %v301 = vadd.f32 %v299, %v300
          %302 = vadd.xlane.f32.xlu0 %v301
          %v303 = vpop.xlane.xlu0 %302
          %v304 = vsub.f32 0.0, %v303
          %v305 = vmul.f32 %v304, 0.020833334
          %vm306 = vcmask 0
          %307 = vst.msk [vmem:[#allocation9] sm:$0x1] %vm306, %v305
        $region52: #{tpu_custom_call.1} parent=31 // pred_fallthru
          _
        // Predicated region
        $region53: #{tpu_custom_call.1} parent=31 // pred_check
          %p308 = pneg %p103
        $region54: #{tpu_custom_call.1} parent=31 // pred_check_branch
          %310 = sbr.rel (%p308) target = $region56
        $region55: #{tpu_custom_call.1} parent=31 // pred_region
          %s312 = ssub.s32 16, 16
          %313 = vsyncadd [#allocation6], %s312
          %s315 = sshll.u32 [#allocation9], 4
          %s316 = int_to_ptr.vmem [resolvable:$true] %s315
          %318 = dma.vmem_to_hbm [thread:$0]  %s316, 16, %s3, [#allocation6]
        $region56: #{tpu_custom_call.1} parent=31 // pred_fallthru
          _
        // Predicated region
        $region57: #{tpu_custom_call.1} parent=31 // pred_check
          %p319 = pneg %p124
        $region58: #{tpu_custom_call.1} parent=31 // pred_check_branch
          %321 = sbr.rel (%p319) target = $region60
        $region59: #{tpu_custom_call.1} parent=31 // pred_region
          %s323 = ssub.s32 16, 16
          %324 = vsyncadd [#allocation11], %s323
          %s326 = sshll.u32 [#allocation10], 4
          %s327 = int_to_ptr.vmem [resolvable:$true] %s326
          %329 = dma.vmem_to_hbm [thread:$0]  %s327, 16, %s4, [#allocation11]
        $region60: #{tpu_custom_call.1} parent=31 // pred_fallthru
          _
        // Predicated region
        $region61: #{tpu_custom_call.1} parent=31 // pred_check
          %p330 = pneg %p103
        $region62: #{tpu_custom_call.1} parent=31 // pred_check_branch
          %332 = sbr.rel (%p330) target = $region64
        $region63: #{tpu_custom_call.1} parent=31 // pred_region
          %333 = dma.done [#allocation6], 16
        $region64: #{tpu_custom_call.1} parent=31 // pred_fallthru
          _
        // Predicated region
        $region65: #{tpu_custom_call.1} parent=31 // pred_check
          %p334 = pneg %p124
        $region66: #{tpu_custom_call.1} parent=31 // pred_check_branch
          %336 = sbr.rel (%p334) target = $region68
        $region67: #{tpu_custom_call.1} parent=31 // pred_region
          %337 = dma.done [#allocation11], 16
        $region68: #{tpu_custom_call.1} parent=31 // pred_fallthru
          _
      $region32: #{tpu_custom_call.1} parent=5 // pred_fallthru
        _
      %p338 = scmp.le.s32.totalorder 2, %s17
      // Predicated region
      $region69: #{tpu_custom_call.1} parent=5 // pred_check
        %p339 = pneg %p338
      $region70: #{tpu_custom_call.1} parent=5 // pred_check_branch
        %341 = sbr.rel (%p339) target = $region72
      $region71: #{tpu_custom_call.1} parent=5 // pred_region
        %s342 = ssub.s32 %s17, 2
      $region72: #{tpu_custom_call.1} parent=5 // pred_fallthru
        _
    $region6: #{tpu_custom_call.1} parent=1 // loop_footer
      %s21 = sadd.s32 1, %s17
    $region7: #{tpu_custom_call.1} parent=1 // loop_footer_branch
      %16 = sbr.rel target = $region3
    $region8: #{tpu_custom_call.1} parent=1 // loop_exit
      _
    %343 = vsyncpa [#allocation5], 1
    %s344 = scalar_lea.sflag [#allocation5], 1
    %345 = vsyncpa %s344, 1
    %346 = vsyncpa [#allocation8], 1
    %s347 = scalar_lea.sflag [#allocation8], 1
    %348 = vsyncpa %s347, 1
    %349 = vsyncpa [#allocation6], 1
    %s350 = scalar_lea.sflag [#allocation6], 1
    %351 = vsyncpa %s350, 1
    %352 = vsyncpa [#allocation11], 1

</llo_original>
